<compile_context>
chip_gen: v7x
topology: tpu7x:2x2x1
jax: 0.10.0
libtpu: 0.0.40
codegen_flags: <defaults>
</compile_context>

<pallas_src>
import functools

import jax
import jax.numpy as jnp
from jax.experimental import pallas as pl
from jax.experimental.pallas import tpu as pltpu


def _round_up(x, m):
    return ((x + m - 1) // m) * m


def _cdiv(a, b):
    return (a + b - 1) // b


def _vmem_capacity_bytes():
    """Per-TensorCore VMEM capacity; conservative (v7x) fallback off-TPU."""
    try:
        return int(pltpu.get_tpu_info().vmem_capacity_bytes)
    except Exception:
        return 64 << 20


def _num_tensorcores():
    """Best-effort TC-per-chip count (v7x = 2); defaults to 1 when unknown."""
    try:
        info = pltpu.get_tpu_info()
        for name in ("num_cores", "num_tensorcores", "tensorcores_per_chip",
                     "cores_per_chip", "core_count"):
            v = getattr(info, name, None)
            if v:
                return int(v)
    except Exception:
        pass
    return 1


def _pick_tk(K, target):
    """Largest K tile <= target (multiple of 128), preferring an exact divisor
    of round_up(K, 128) so no K padding pass over x/W is needed."""
    kr = _round_up(max(K, 1), 128)
    blocks = kr // 128
    tgt = max(1, min(target // 128, blocks))
    for cand in range(tgt, 0, -1):
        if blocks % cand == 0:
            if cand * 128 >= min(1024, kr):
                return cand * 128
            break
    return tgt * 128  # no good divisor: accept padding K up to a multiple


# ---------------------------------------------------------------------------
# Fused Linear(+bias) + Dropout(p) + ReLU kernel
# ---------------------------------------------------------------------------
def _linear_dropout_relu_kernel(x_ref, w_ref, b_ref, *rest, p_drop, training):
    if training:
        bits_ref, o_ref = rest
    else:
        (o_ref,) = rest

    # Grid positions read at the TOP LEVEL of the kernel body (never inside a
    # pl.when body) so every lowering path can substitute them.
    k = pl.program_id(2)
    k_last = pl.num_programs(2) - 1

    @pl.when(k == 0)
    def _init():
        o_ref[...] = jnp.zeros_like(o_ref)

    # bf16 x bf16 -> f32 accumulation on the MXU, directly into the resident
    # f32 output block (its (i, j) block index is constant over k).
    o_ref[...] += jnp.dot(x_ref[...].astype(jnp.bfloat16),
                          w_ref[...].astype(jnp.bfloat16),
                          preferred_element_type=jnp.float32)

    @pl.when(k == k_last)
    def _finalize():
        out = o_ref[...] + b_ref[...]                    # f32 epilogue
        if training and p_drop > 0.0:
            keep_prob = 1.0 - p_drop
            thresh = min(int(round(keep_prob * 2.0 ** 32)), 2 ** 32 - 1)
            keep = bits_ref[...] < jnp.uint32(thresh)    # full 32-bit compare
            out = jnp.where(keep, out * (1.0 / keep_prob), 0.0)
        o_ref[...] = jnp.maximum(out, 0.0).astype(o_ref.dtype)


def linear_dropout_relu(x, w, b, *, p_drop=0.5, training=False, seed=0,
                        tm_cap=512, tk_target=4096):
    """relu(dropout(x @ w + b)).  x: (M, K), w: (K, N), b: (N,)."""
    M, K = x.shape
    Kw, N = w.shape
    assert K == Kw and b.shape == (N,)

    # ---- tile selection ----------------------------------------------------
    nr = _round_up(N, 128)
    m_tiles = _cdiv(_round_up(max(M, 1), 8), tm_cap)
    tm = _round_up(_cdiv(max(M, 1), m_tiles), 8)
    tn = 256 if nr % 256 == 0 else 128
    # Multi-TC chips (v7x): with a single M tile keep >=2 parallel N tiles so
    # both TensorCores get work; single-TC chips keep one full-width j tile.
    if tn == 256 and nr >= 256 and m_tiles == 1 and _num_tensorcores() >= 2:
        tn = 128
    tk = _pick_tk(K, tk_target)

    cap = _vmem_capacity_bytes()
    budget = max(24 << 20, (cap * 3) // 5)
    x_itemsize = 2 if x.dtype == jnp.bfloat16 else 4

    def footprint(tm_, tk_, tn_):
        fp = 2 * tm_ * tk_ * x_itemsize       # x tiles (double-buffered)
        fp += 2 * tk_ * tn_ * 2               # bf16 weight tiles
        fp += 2 * tn_ * 4                     # bias tile
        fp += 2 * tm_ * tn_ * 4               # resident f32 output tile
        if training:
            fp += 2 * tm_ * tn_ * 4           # dropout bits tile
        return fp

    while footprint(tm, tk, tn) > budget and tk > 1024:
        tk = max(1024, ((tk // 2) // 128) * 128)
    while footprint(tm, tk, tn) > budget and tm > 8:
        tm = max(8, ((tm // 2) // 8) * 8)

    mp = _round_up(max(M, 1), tm)
    kp = _round_up(K, tk)
    np_ = _round_up(N, tn)

    # ---- operand prep (skip pads/casts whenever possible) -------------------
    x_in = x
    if (mp, kp) != (M, K):
        x_in = jnp.pad(x, ((0, mp - M), (0, kp - K))).astype(jnp.bfloat16)
    # else: x streamed as-is; cast to bf16 in-kernel (single HBM pass).

    w_in = w if w.dtype == jnp.bfloat16 else w.astype(jnp.bfloat16)
    if (kp, np_) != (K, N):
        w_in = jnp.pad(w_in, ((0, kp - K), (0, np_ - N)))

    b_in = b.astype(jnp.float32).reshape(1, N)
    if np_ != N:
        b_in = jnp.pad(b_in, ((0, 0), (0, np_ - N)))

    grid = (mp // tm, np_ // tn, kp // tk)    # reduction (K) innermost

    in_specs = [
        pl.BlockSpec((tm, tk), lambda i, j, k: (i, k)),
        pl.BlockSpec((tk, tn), lambda i, j, k: (k, j)),
        pl.BlockSpec((1, tn), lambda i, j, k: (0, j)),
    ]
    args = [x_in, w_in, b_in]
    if training:
        bits = jax.random.bits(jax.random.PRNGKey(seed), (mp, np_), jnp.uint32)
        in_specs.append(pl.BlockSpec((tm, tn), lambda i, j, k: (i, j)))
        args.append(bits)

    fp = footprint(tm, tk, tn)
    vmem_limit = int(min(cap - (8 << 20), max(fp + (8 << 20), 32 << 20)))

    kernel = functools.partial(_linear_dropout_relu_kernel,
                               p_drop=float(p_drop), training=bool(training))

    out = pl.pallas_call(
        kernel,
        out_shape=jax.ShapeDtypeStruct((mp, np_), jnp.float32),
        grid=grid,
        in_specs=in_specs,
        out_specs=pl.BlockSpec((tm, tn), lambda i, j, k: (i, j)),
        compiler_params=pltpu.CompilerParams(
            dimension_semantics=("parallel", "parallel", "arbitrary"),
            vmem_limit_bytes=vmem_limit,
        ),
    )(*args)

    if (mp, np_) != (M, N):
        out = out[:M, :N]
    return out


# ---------------------------------------------------------------------------
# Module: parameters + forward (mirrors DaNNBackbone)
# ---------------------------------------------------------------------------
def init_dann_backbone(key, n_input, n_hidden=256):
    """nn.Linear-style init; weight stored pre-transposed (K, N) and pre-cast
    to bf16 so the forward pass never pays a per-call f32->bf16 HBM pass."""
    kw, kb = jax.random.split(key)
    bound = 1.0 / (n_input ** 0.5)
    w = jax.random.uniform(kw, (n_input, n_hidden), jnp.float32, -bound, bound)
    b = jax.random.uniform(kb, (n_hidden,), jnp.float32, -bound, bound)
    return {"w": w.astype(jnp.bfloat16), "b": b}


def dann_backbone_forward(x, params, *, training=False, seed=0):
    """x: (N, ...) of any trailing shape; returns (N, n_hidden) float32."""
    n = x.shape[0]
    x_flat = x.reshape(n, -1)                         # x.view(x.size(0), -1)
    if x_flat.dtype not in (jnp.float32, jnp.bfloat16):
        x_flat = x_flat.astype(jnp.float32)
    return linear_dropout_relu(x_flat, params["w"], params["b"],
                               p_drop=0.5, training=training, seed=seed)


if __name__ == "__main__":
    key = jax.random.PRNGKey(0)
    k_params, k_x = jax.random.split(key)

    # Small shapes consistent with the module: n_input = 4*16*16 = 1024.
    N_BATCH, C, H, W = 2, 4, 16, 16
    n_input = C * H * W
    n_hidden = 256

    params = init_dann_backbone(k_params, n_input, n_hidden)
    x = jax.random.normal(k_x, (N_BATCH, C, H, W), jnp.float32)

    # Eval-mode forward (dropout = identity, like module.eval()).
    fwd = jax.jit(functools.partial(dann_backbone_forward, params=params))
    feat = jax.block_until_ready(fwd(x))

    # Reference against the same bf16-quantized operands.
    xq = x.reshape(N_BATCH, -1).astype(jnp.bfloat16).astype(jnp.float32)
    wq = params["w"].astype(jnp.float32)
    ref = jnp.maximum(xq @ wq + params["b"], 0.0)

    assert feat.shape == (N_BATCH, n_hidden), feat.shape
    assert feat.dtype == jnp.float32
    assert bool(jnp.all(jnp.isfinite(feat)))
    assert bool(jnp.allclose(feat, ref, atol=2e-2, rtol=2e-2)), \
        float(jnp.max(jnp.abs(feat - ref)))

    # Training-mode forward (p=0.5 dropout fused into the GEMM epilogue).
    fwd_tr = jax.jit(functools.partial(dann_backbone_forward, params=params,
                                       training=True, seed=123))
    feat_tr = jax.block_until_ready(fwd_tr(x))
    assert feat_tr.shape == (N_BATCH, n_hidden)
    assert feat_tr.dtype == jnp.float32
    assert bool(jnp.all(jnp.isfinite(feat_tr)))
    assert bool(jnp.all(feat_tr >= 0.0))
    # Every element is either dropped (exactly 0) or kept (2x the eval value).
    ok = (feat_tr == 0.0) | jnp.isclose(feat_tr, 2.0 * ref, atol=2e-2, rtol=2e-2)
    assert bool(jnp.all(ok))

    print("KERNEL_OK")
</pallas_src>

<mosaic_0001>
module attributes {stable_mosaic.version = 11 : i64} {
  func.func @_linear_dropout_relu_kernel(%arg0: i32, %arg1: i32, %arg2: i32, %arg3: memref<8x1024xbf16, #tpu.memory_space<vmem>>, %arg4: memref<1024x256xbf16, #tpu.memory_space<vmem>>, %arg5: memref<1x256xf32, #tpu.memory_space<vmem>>, %arg6: memref<8x256xf32, #tpu.memory_space<vmem>>) attributes {dimension_semantics = [#tpu.dimension_semantics<parallel>, #tpu.dimension_semantics<parallel>, #tpu.dimension_semantics<arbitrary>], iteration_bounds = array<i64: 1, 1, 1>, scalar_prefetch = 0 : i64, scratch_operands = 0 : i64, tpu.core_type = #tpu.core_type<tc>, window_params = [{transform_indices = @transform_0, window_bounds = array<i64: 8, 1024>}, {transform_indices = @transform_1, window_bounds = array<i64: 1024, 256>}, {transform_indices = @transform_2, window_bounds = array<i64: 1, 256>}, {transform_indices = @transform_3, window_bounds = array<i64: 8, 256>}]} {
    %c0_i32 = arith.constant 0 : i32
    %0 = arith.cmpi eq, %arg2, %c0_i32 : i32
    %1 = arith.extui %0 : i1 to i32
    %c0_i32_0 = arith.constant 0 : i32
    %2 = arith.cmpi ne, %1, %c0_i32_0 : i32
    scf.if %2 {
      %cst_10 = arith.constant 0.000000e+00 : f32
      %12 = vector.broadcast %cst_10 : f32 to vector<8x256xf32>
      %c0_11 = arith.constant 0 : index
      %c0_12 = arith.constant 0 : index
      %13 = vector.load %arg6[%c0_11, %c0_12] : memref<8x256xf32, #tpu.memory_space<vmem>>, vector<8x256xf32>
      tpu.vector_store %arg6[%c0_11, %c0_12], %12 {strides = array<i32>} : memref<8x256xf32, #tpu.memory_space<vmem>>, vector<8x256xf32>,
    } else {
    }
    %c0 = arith.constant 0 : index
    %c0_1 = arith.constant 0 : index
    %3 = vector.load %arg6[%c0, %c0_1] : memref<8x256xf32, #tpu.memory_space<vmem>>, vector<8x256xf32>
    %c0_2 = arith.constant 0 : index
    %c0_3 = arith.constant 0 : index
    %4 = vector.load %arg3[%c0_2, %c0_3] : memref<8x1024xbf16, #tpu.memory_space<vmem>>, vector<8x1024xbf16>
    %c0_4 = arith.constant 0 : index
    %c0_5 = arith.constant 0 : index
    %5 = vector.load %arg4[%c0_4, %c0_5] : memref<1024x256xbf16, #tpu.memory_space<vmem>>, vector<1024x256xbf16>
    %cst = arith.constant dense<0.000000e+00> : vector<8x256xf32>
    %6 = tpu.matmul %4, %5, %cst {dimension_numbers = #tpu.dot_dimension_numbers<[1], [0], [0], [1], [0, 0, 1, 1], [], []>} : vector<8x1024xbf16>, vector<1024x256xbf16>, vector<8x256xf32> -> vector<8x256xf32>
    %7 = arith.addf %3, %6 : vector<8x256xf32>
    %c0_6 = arith.constant 0 : index
    %c0_7 = arith.constant 0 : index
    %8 = vector.load %arg6[%c0_6, %c0_7] : memref<8x256xf32, #tpu.memory_space<vmem>>, vector<8x256xf32>
    tpu.vector_store %arg6[%c0_6, %c0_7], %7 {strides = array<i32>} : memref<8x256xf32, #tpu.memory_space<vmem>>, vector<8x256xf32>,
    %c0_i32_8 = arith.constant 0 : i32
    %9 = arith.cmpi eq, %arg2, %c0_i32_8 : i32
    %10 = arith.extui %9 : i1 to i32
    %c0_i32_9 = arith.constant 0 : i32
    %11 = arith.cmpi ne, %10, %c0_i32_9 : i32
    scf.if %11 {
      %c0_10 = arith.constant 0 : index
      %c0_11 = arith.constant 0 : index
      %12 = vector.load %arg6[%c0_10, %c0_11] : memref<8x256xf32, #tpu.memory_space<vmem>>, vector<8x256xf32>
      %c0_12 = arith.constant 0 : index
      %c0_13 = arith.constant 0 : index
      %13 = vector.load %arg5[%c0_12, %c0_13] : memref<1x256xf32, #tpu.memory_space<vmem>>, vector<1x256xf32>
      %14 = vector.broadcast %13 : vector<1x256xf32> to vector<8x256xf32>
      %15 = arith.addf %12, %14 : vector<8x256xf32>
      %cst_14 = arith.constant 0.000000e+00 : f32
      %16 = vector.broadcast %cst_14 : f32 to vector<8x256xf32>
      %17 = arith.maximumf %15, %16 : vector<8x256xf32>
      %c0_15 = arith.constant 0 : index
      %c0_16 = arith.constant 0 : index
      %18 = vector.load %arg6[%c0_15, %c0_16] : memref<8x256xf32, #tpu.memory_space<vmem>>, vector<8x256xf32>
      tpu.vector_store %arg6[%c0_15, %c0_16], %17 {strides = array<i32>} : memref<8x256xf32, #tpu.memory_space<vmem>>, vector<8x256xf32>,
    } else {
    }
    return
  }
  func.func @transform_0(%arg0: i32, %arg1: i32, %arg2: i32) -> (i32, i32) {
    %c0_i32 = arith.constant 0 : i32
    return %arg0, %arg2 : i32, i32
  }
  func.func @transform_1(%arg0: i32, %arg1: i32, %arg2: i32) -> (i32, i32) {
    %c0_i32 = arith.constant 0 : i32
    return %arg2, %arg1 : i32, i32
  }
  func.func @transform_2(%arg0: i32, %arg1: i32, %arg2: i32) -> (i32, i32) {
    %c0_i32 = arith.constant 0 : i32
    %c0_i32_0 = arith.constant 0 : i32
    return %c0_i32, %arg1 : i32, i32
  }
  func.func @transform_3(%arg0: i32, %arg1: i32, %arg2: i32) -> (i32, i32) {
    %c0_i32 = arith.constant 0 : i32
    return %arg0, %arg1 : i32, i32
  }
}

</mosaic_0001>

<llo_original>
// kernel: dann_backbone_forward.1
$region0: #{dann_backbone_forward.1}
  #allocation0 [shape = 'u32[]', space=smem, size = 0x4, offset = 0x4, fixed_abs, tag = 'smem constant byte address 0x4 - core index']
  #allocation1 [shape = 'u32[144,128]{1,0:T(1,128)}', space=vmem, size = 0x12000, scoped, tag = 'internal scratch']
  %s0 = inlined_call_operand.vmem [shape: bf16[8,1024], index: 0, kind: input, shape index: {}]
  %s1 = inlined_call_operand.vmem [shape: bf16[1024,256], index: 1, kind: input, shape index: {}]
  %s2 = inlined_call_operand.vmem [shape: f32[1,256], index: 2, kind: input, shape index: {}]
  %s3 = inlined_call_operand.vmem [shape: f32[8,256], index: 3, kind: output, shape index: {}]
  %s4 = sld [smem:[#allocation0]]
  $region30: #{dann_backbone_forward.1} parent=0
    _
  %s6 = ssub.s32 1, %s4
  %s7 = scalar_select 0, %s6, %s4
  // Predicated region
  $region2: #{dann_backbone_forward.1} parent=0 // pred_check
    _
  $region3: #{dann_backbone_forward.1} parent=0 // pred_check_branch
    %9 = sbr.rel (0) target = $region5
  $region4: #{dann_backbone_forward.1} parent=0 // pred_region
    _
  $region5: #{dann_backbone_forward.1} parent=0 // pred_fallthru
    _
  // Predicated region
  $region6: #{dann_backbone_forward.1} parent=0 // pred_check
    _
  $region7: #{dann_backbone_forward.1} parent=0 // pred_check_branch
    %11 = sbr.rel (0) target = $region9
  $region8: #{dann_backbone_forward.1} parent=0 // pred_region
    _
  $region9: #{dann_backbone_forward.1} parent=0 // pred_fallthru
    _
  // Predicated region
  $region10: #{dann_backbone_forward.1} parent=0 // pred_check
    _
  $region11: #{dann_backbone_forward.1} parent=0 // pred_check_branch
    %13 = sbr.rel (0) target = $region13
  $region12: #{dann_backbone_forward.1} parent=0 // pred_region
    _
  $region13: #{dann_backbone_forward.1} parent=0 // pred_fallthru
    _
  %p14 = scmp.eq.s32.totalorder 0, 0
  // Predicated region
  $region14: #{dann_backbone_forward.1} parent=0 // pred_check
    %p15 = pneg %p14
  $region15: #{dann_backbone_forward.1} parent=0 // pred_check_branch
    %17 = sbr.rel (%p15) target = $region17
  $region16: #{dann_backbone_forward.1} parent=0 // pred_region
    %18 = vst [vmem:[%s3] sm:$0xff] 0.0
    %19 = vst [vmem:[%s3 + $0x8] sm:$0xff] 0.0
  $region17: #{dann_backbone_forward.1} parent=0 // pred_fallthru
    _
  %v20 = vld [vmem:[%s3] sm:$0xff]
  %v21 = vld [vmem:[%s3 + $0x8] sm:$0xff]
  %v22 = vld [vmem:[%s0] sm:$0xff]
  %v23 = vld [vmem:[%s0 + $0x8] sm:$0xff]
  %v24 = vld [vmem:[%s0 + $0x10] sm:$0xff]
  %v25 = vld [vmem:[%s0 + $0x18] sm:$0xff]
  %v26 = vld [vmem:[%s1] sm:$0xff]
  %v27 = vld [vmem:[%s1 + $0x8] sm:$0xff]
  %v28 = vld [vmem:[%s1 + $0x10] sm:$0xff]
  %v29 = vld [vmem:[%s1 + $0x18] sm:$0xff]
  %v30 = vld [vmem:[%s1 + $0x20] sm:$0xff]
  %v31 = vld [vmem:[%s1 + $0x28] sm:$0xff]
  %v32 = vld [vmem:[%s1 + $0x30] sm:$0xff]
  %v33 = vld [vmem:[%s1 + $0x38] sm:$0xff]
  %v34 = vld [vmem:[%s1 + $0x40] sm:$0xff]
  %v35 = vld [vmem:[%s1 + $0x48] sm:$0xff]
  %v36 = vld [vmem:[%s1 + $0x50] sm:$0xff]
  %v37 = vld [vmem:[%s1 + $0x58] sm:$0xff]
  %v38 = vld [vmem:[%s1 + $0x60] sm:$0xff]
  %v39 = vld [vmem:[%s1 + $0x68] sm:$0xff]
  %v40 = vld [vmem:[%s1 + $0x70] sm:$0xff]
  %v41 = vld [vmem:[%s1 + $0x78] sm:$0xff]
  %v42 = vld [vmem:[%s1 + $0x80] sm:$0xff]
  %v43 = vld [vmem:[%s1 + $0x88] sm:$0xff]
  %v44 = vld [vmem:[%s1 + $0x90] sm:$0xff]
  %v45 = vld [vmem:[%s1 + $0x98] sm:$0xff]
  %v46 = vld [vmem:[%s1 + $0xa0] sm:$0xff]
  %v47 = vld [vmem:[%s1 + $0xa8] sm:$0xff]
  %v48 = vld [vmem:[%s1 + $0xb0] sm:$0xff]
  %v49 = vld [vmem:[%s1 + $0xb8] sm:$0xff]
  %v50 = vld [vmem:[%s1 + $0xc0] sm:$0xff]
  %v51 = vld [vmem:[%s1 + $0xc8] sm:$0xff]
  %v52 = vld [vmem:[%s1 + $0xd0] sm:$0xff]
  %v53 = vld [vmem:[%s1 + $0xd8] sm:$0xff]
  %v54 = vld [vmem:[%s1 + $0xe0] sm:$0xff]
  %v55 = vld [vmem:[%s1 + $0xe8] sm:$0xff]
  %v56 = vld [vmem:[%s1 + $0xf0] sm:$0xff]
  %v57 = vld [vmem:[%s1 + $0xf8] sm:$0xff]
  %v58 = vld [vmem:[%s1 + $0x100] sm:$0xff]
  %v59 = vld [vmem:[%s1 + $0x108] sm:$0xff]
  %v60 = vld [vmem:[%s1 + $0x110] sm:$0xff]
  %v61 = vld [vmem:[%s1 + $0x118] sm:$0xff]
  %v62 = vld [vmem:[%s1 + $0x120] sm:$0xff]
  %v63 = vld [vmem:[%s1 + $0x128] sm:$0xff]
  %v64 = vld [vmem:[%s1 + $0x130] sm:$0xff]
  %v65 = vld [vmem:[%s1 + $0x138] sm:$0xff]
  %v66 = vld [vmem:[%s1 + $0x140] sm:$0xff]
  %v67 = vld [vmem:[%s1 + $0x148] sm:$0xff]
  %v68 = vld [vmem:[%s1 + $0x150] sm:$0xff]
  %v69 = vld [vmem:[%s1 + $0x158] sm:$0xff]
  %v70 = vld [vmem:[%s1 + $0x160] sm:$0xff]
  %v71 = vld [vmem:[%s1 + $0x168] sm:$0xff]
  %v72 = vld [vmem:[%s1 + $0x170] sm:$0xff]
  %v73 = vld [vmem:[%s1 + $0x178] sm:$0xff]
  %v74 = vld [vmem:[%s1 + $0x180] sm:$0xff]
  %v75 = vld [vmem:[%s1 + $0x188] sm:$0xff]
  %v76 = vld [vmem:[%s1 + $0x190] sm:$0xff]
  %v77 = vld [vmem:[%s1 + $0x198] sm:$0xff]
  %v78 = vld [vmem:[%s1 + $0x1a0] sm:$0xff]
  %v79 = vld [vmem:[%s1 + $0x1a8] sm:$0xff]
  %v80 = vld [vmem:[%s1 + $0x1b0] sm:$0xff]
  %v81 = vld [vmem:[%s1 + $0x1b8] sm:$0xff]
  %v82 = vld [vmem:[%s1 + $0x1c0] sm:$0xff]
  %v83 = vld [vmem:[%s1 + $0x1c8] sm:$0xff]
  %v84 = vld [vmem:[%s1 + $0x1d0] sm:$0xff]
  %v85 = vld [vmem:[%s1 + $0x1d8] sm:$0xff]
  %v86 = vld [vmem:[%s1 + $0x1e0] sm:$0xff]
  %v87 = vld [vmem:[%s1 + $0x1e8] sm:$0xff]
  %v88 = vld [vmem:[%s1 + $0x1f0] sm:$0xff]
  %v89 = vld [vmem:[%s1 + $0x1f8] sm:$0xff]
  %v90 = vld [vmem:[%s1 + $0x200] sm:$0xff]
  %v91 = vld [vmem:[%s1 + $0x208] sm:$0xff]
  %v92 = vld [vmem:[%s1 + $0x210] sm:$0xff]
  %v93 = vld [vmem:[%s1 + $0x218] sm:$0xff]
  %v94 = vld [vmem:[%s1 + $0x220] sm:$0xff]
  %v95 = vld [vmem:[%s1 + $0x228] sm:$0xff]
  %v96 = vld [vmem:[%s1 + $0x230] sm:$0xff]
  %v97 = vld [vmem:[%s1 + $0x238] sm:$0xff]
  %v98 = vld [vmem:[%s1 + $0x240] sm:$0xff]
  %v99 = vld [vmem:[%s1 + $0x248] sm:$0xff]
  %v100 = vld [vmem:[%s1 + $0x250] sm:$0xff]
  %v101 = vld [vmem:[%s1 + $0x258] sm:$0xff]
  %v102 = vld [vmem:[%s1 + $0x260] sm:$0xff]
  %v103 = vld [vmem:[%s1 + $0x268] sm:$0xff]
  %v104 = vld [vmem:[%s1 + $0x270] sm:$0xff]
  %v105 = vld [vmem:[%s1 + $0x278] sm:$0xff]
  %v106 = vld [vmem:[%s1 + $0x280] sm:$0xff]
  %v107 = vld [vmem:[%s1 + $0x288] sm:$0xff]
  %v108 = vld [vmem:[%s1 + $0x290] sm:$0xff]
  %v109 = vld [vmem:[%s1 + $0x298] sm:$0xff]
  %v110 = vld [vmem:[%s1 + $0x2a0] sm:$0xff]
  %v111 = vld [vmem:[%s1 + $0x2a8] sm:$0xff]
  %v112 = vld [vmem:[%s1 + $0x2b0] sm:$0xff]
  %v113 = vld [vmem:[%s1 + $0x2b8] sm:$0xff]
  %v114 = vld [vmem:[%s1 + $0x2c0] sm:$0xff]
  %v115 = vld [vmem:[%s1 + $0x2c8] sm:$0xff]
  %v116 = vld [vmem:[%s1 + $0x2d0] sm:$0xff]
  %v117 = vld [vmem:[%s1 + $0x2d8] sm:$0xff]
  %v118 = vld [vmem:[%s1 + $0x2e0] sm:$0xff]
  %v119 = vld [vmem:[%s1 + $0x2e8] sm:$0xff]
  %v120 = vld [vmem:[%s1 + $0x2f0] sm:$0xff]
  %v121 = vld [vmem:[%s1 + $0x2f8] sm:$0xff]
  %v122 = vld [vmem:[%s1 + $0x300] sm:$0xff]
  %v123 = vld [vmem:[%s1 + $0x308] sm:$0xff]
  %v124 = vld [vmem:[%s1 + $0x310] sm:$0xff]
  %v125 = vld [vmem:[%s1 + $0x318] sm:$0xff]
  %v126 = vld [vmem:[%s1 + $0x320] sm:$0xff]
  %v127 = vld [vmem:[%s1 + $0x328] sm:$0xff]
  %v128 = vld [vmem:[%s1 + $0x330] sm:$0xff]
  %v129 = vld [vmem:[%s1 + $0x338] sm:$0xff]
  %v130 = vld [vmem:[%s1 + $0x340] sm:$0xff]
  %v131 = vld [vmem:[%s1 + $0x348] sm:$0xff]
  %v132 = vld [vmem:[%s1 + $0x350] sm:$0xff]
  %v133 = vld [vmem:[%s1 + $0x358] sm:$0xff]
  %v134 = vld [vmem:[%s1 + $0x360] sm:$0xff]
  %v135 = vld [vmem:[%s1 + $0x368] sm:$0xff]
  %v136 = vld [vmem:[%s1 + $0x370] sm:$0xff]
  %v137 = vld [vmem:[%s1 + $0x378] sm:$0xff]
  %v138 = vld [vmem:[%s1 + $0x380] sm:$0xff]
  %v139 = vld [vmem:[%s1 + $0x388] sm:$0xff]
  %v140 = vld [vmem:[%s1 + $0x390] sm:$0xff]
  %v141 = vld [vmem:[%s1 + $0x398] sm:$0xff]
  %v142 = vld [vmem:[%s1 + $0x3a0] sm:$0xff]
  %v143 = vld [vmem:[%s1 + $0x3a8] sm:$0xff]
  %v144 = vld [vmem:[%s1 + $0x3b0] sm:$0xff]
  %v145 = vld [vmem:[%s1 + $0x3b8] sm:$0xff]
  %v146 = vld [vmem:[%s1 + $0x3c0] sm:$0xff]
  %v147 = vld [vmem:[%s1 + $0x3c8] sm:$0xff]
  %v148 = vld [vmem:[%s1 + $0x3d0] sm:$0xff]
  %v149 = vld [vmem:[%s1 + $0x3d8] sm:$0xff]
  %v150 = vld [vmem:[%s1 + $0x3e0] sm:$0xff]
  %v151 = vld [vmem:[%s1 + $0x3e8] sm:$0xff]
  %v152 = vld [vmem:[%s1 + $0x3f0] sm:$0xff]
  %v153 = vld [vmem:[%s1 + $0x3f8] sm:$0xff]
  %v158 = vunpack.c.l.b16 %v22
  %v159 = vunpack.c.h.b16 %v22
  %v160 = vunpack.c.l.b16 %v23
  %v161 = vunpack.c.h.b16 %v23
  %v162 = vunpack.c.l.b16 %v24
  %v163 = vunpack.c.h.b16 %v24
  %v164 = vunpack.c.l.b16 %v25
  %v165 = vunpack.c.h.b16 %v25
  %v166 = vpack.c.b16 %v158, %v158
  %v167 = vpack.c.b16 %v159, %v159
  %v168 = vpack.c.b16 %v160, %v160
  %v169 = vpack.c.b16 %v161, %v161
  %v170 = vpack.c.b16 %v162, %v162
  %v171 = vpack.c.b16 %v163, %v163
  %v172 = vpack.c.b16 %v164, %v164
  %v173 = vpack.c.b16 %v165, %v165
  %v310 = vunpack.c.l.b16 %v26
  %v311 = vunpack.c.h.b16 %v26
  %v312 = vunpack.c.l.b16 %v27
  %v313 = vunpack.c.h.b16 %v27
  %v314 = vunpack.c.l.b16 %v28
  %v315 = vunpack.c.h.b16 %v28
  %v316 = vunpack.c.l.b16 %v29
  %v317 = vunpack.c.h.b16 %v29
  %v318 = vunpack.c.l.b16 %v30
  %v319 = vunpack.c.h.b16 %v30
  %v320 = vunpack.c.l.b16 %v31
  %v321 = vunpack.c.h.b16 %v31
  %v322 = vunpack.c.l.b16 %v32
  %v323 = vunpack.c.h.b16 %v32
  %v324 = vunpack.c.l.b16 %v33
  %v325 = vunpack.c.h.b16 %v33
  %v326 = vunpack.c.l.b16 %v34
  %v327 = vunpack.c.h.b16 %v34
  %v328 = vunpack.c.l.b16 %v35
  %v329 = vunpack.c.h.b16 %v35
  %v330 = vunpack.c.l.b16 %v36
  %v331 = vunpack.c.h.b16 %v36
  %v332 = vunpack.c.l.b16 %v37
  %v333 = vunpack.c.h.b16 %v37
  %v334 = vunpack.c.l.b16 %v38
  %v335 = vunpack.c.h.b16 %v38
  %v336 = vunpack.c.l.b16 %v39
  %v337 = vunpack.c.h.b16 %v39
  %v338 = vunpack.c.l.b16 %v40
  %v339 = vunpack.c.h.b16 %v40
  %v340 = vunpack.c.l.b16 %v41
  %v341 = vunpack.c.h.b16 %v41
  %v342 = vunpack.c.l.b16 %v42
  %v343 = vunpack.c.h.b16 %v42
  %v344 = vunpack.c.l.b16 %v43
  %v345 = vunpack.c.h.b16 %v43
  %v346 = vunpack.c.l.b16 %v44
  %v347 = vunpack.c.h.b16 %v44
  %v348 = vunpack.c.l.b16 %v45
  %v349 = vunpack.c.h.b16 %v45
  %v350 = vunpack.c.l.b16 %v46
  %v351 = vunpack.c.h.b16 %v46
  %v352 = vunpack.c.l.b16 %v47
  %v353 = vunpack.c.h.b16 %v47
  %v354 = vunpack.c.l.b16 %v48
  %v355 = vunpack.c.h.b16 %v48
  %v356 = vunpack.c.l.b16 %v49
  %v357 = vunpack.c.h.b16 %v49
  %v358 = vunpack.c.l.b16 %v50
  %v359 = vunpack.c.h.b16 %v50
  %v360 = vunpack.c.l.b16 %v51
  %v361 = vunpack.c.h.b16 %v51
  %v362 = vunpack.c.l.b16 %v52
  %v363 = vunpack.c.h.b16 %v52
  %v364 = vunpack.c.l.b16 %v53
  %v365 = vunpack.c.h.b16 %v53
  %v366 = vunpack.c.l.b16 %v54
  %v367 = vunpack.c.h.b16 %v54
  %v368 = vunpack.c.l.b16 %v55
  %v369 = vunpack.c.h.b16 %v55
  %v370 = vunpack.c.l.b16 %v56
  %v371 = vunpack.c.h.b16 %v56
  %v372 = vunpack.c.l.b16 %v57
  %v373 = vunpack.c.h.b16 %v57
  %v374 = vunpack.c.l.b16 %v58
  %v375 = vunpack.c.h.b16 %v58
  %v376 = vunpack.c.l.b16 %v59
  %v377 = vunpack.c.h.b16 %v59
  %v378 = vunpack.c.l.b16 %v60
  %v379 = vunpack.c.h.b16 %v60
  %v380 = vunpack.c.l.b16 %v61
  %v381 = vunpack.c.h.b16 %v61
  %v382 = vunpack.c.l.b16 %v62
  %v383 = vunpack.c.h.b16 %v62
  %v384 = vunpack.c.l.b16 %v63
  %v385 = vunpack.c.h.b16 %v63
  %v386 = vunpack.c.l.b16 %v64
  %v387 = vunpack.c.h.b16 %v64
  %v388 = vunpack.c.l.b16 %v65
  %v389 = vunpack.c.h.b16 %v65
  %v390 = vunpack.c.l.b16 %v66
  %v391 = vunpack.c.h.b16 %v66
  %v392 = vunpack.c.l.b16 %v67
  %v393 = vunpack.c.h.b16 %v67
  %v394 = vunpack.c.l.b16 %v68
  %v395 = vunpack.c.h.b16 %v68
  %v396 = vunpack.c.l.b16 %v69
  %v397 = vunpack.c.h.b16 %v69
  %v398 = vunpack.c.l.b16 %v70
  %v399 = vunpack.c.h.b16 %v70
  %v400 = vunpack.c.l.b16 %v71
  %v401 = vunpack.c.h.b16 %v71
  %v402 = vunpack.c.l.b16 %v72
  %v403 = vunpack.c.h.b16 %v72
  %v404 = vunpack.c.l.b16 %v73
  %v405 = vunpack.c.h.b16 %v73
  %v406 = vunpack.c.l.b16 %v74
  %v407 = vunpack.c.h.b16 %v74
  %v408 = vunpack.c.l.b16 %v75
  %v409 = vunpack.c.h.b16 %v75
  %v410 = vunpack.c.l.b16 %v76
  %v411 = vunpack.c.h.b16 %v76
  %v412 = vunpack.c.l.b16 %v77
  %v413 = vunpack.c.h.b16 %v77
  %v414 = vunpack.c.l.b16 %v78
  %v415 = vunpack.c.h.b16 %v78
  %v416 = vunpack.c.l.b16 %v79
  %v417 = vunpack.c.h.b16 %v79
  %v418 = vunpack.c.l.b16 %v80
  %v419 = vunpack.c.h.b16 %v80
  %v420 = vunpack.c.l.b16 %v81
  %v421 = vunpack.c.h.b16 %v81
  %v422 = vunpack.c.l.b16 %v82
  %v423 = vunpack.c.h.b16 %v82
  %v424 = vunpack.c.l.b16 %v83
  %v425 = vunpack.c.h.b16 %v83
  %v426 = vunpack.c.l.b16 %v84
  %v427 = vunpack.c.h.b16 %v84
  %v428 = vunpack.c.l.b16 %v85
  %v429 = vunpack.c.h.b16 %v85
  %v430 = vunpack.c.l.b16 %v86
  %v431 = vunpack.c.h.b16 %v86
  %v432 = vunpack.c.l.b16 %v87
  %v433 = vunpack.c.h.b16 %v87
  %v434 = vunpack.c.l.b16 %v88
  %v435 = vunpack.c.h.b16 %v88
  %v436 = vunpack.c.l.b16 %v89
  %v437 = vunpack.c.h.b16 %v89
  %v438 = vunpack.c.l.b16 %v90
  %v439 = vunpack.c.h.b16 %v90
  %v440 = vunpack.c.l.b16 %v91
  %v441 = vunpack.c.h.b16 %v91
  %v442 = vunpack.c.l.b16 %v92
  %v443 = vunpack.c.h.b16 %v92
  %v444 = vunpack.c.l.b16 %v93
  %v445 = vunpack.c.h.b16 %v93
  %v446 = vunpack.c.l.b16 %v94
  %v447 = vunpack.c.h.b16 %v94
  %v448 = vunpack.c.l.b16 %v95
  %v449 = vunpack.c.h.b16 %v95
  %v450 = vunpack.c.l.b16 %v96
  %v451 = vunpack.c.h.b16 %v96
  %v452 = vunpack.c.l.b16 %v97
  %v453 = vunpack.c.h.b16 %v97
  %v454 = vunpack.c.l.b16 %v98
  %v455 = vunpack.c.h.b16 %v98
  %v456 = vunpack.c.l.b16 %v99
  %v457 = vunpack.c.h.b16 %v99
  %v458 = vunpack.c.l.b16 %v100
  %v459 = vunpack.c.h.b16 %v100
  %v460 = vunpack.c.l.b16 %v101
  %v461 = vunpack.c.h.b16 %v101
  %v462 = vunpack.c.l.b16 %v102
  %v463 = vunpack.c.h.b16 %v102
  %v464 = vunpack.c.l.b16 %v103
  %v465 = vunpack.c.h.b16 %v103
  %v466 = vunpack.c.l.b16 %v104
  %v467 = vunpack.c.h.b16 %v104
  %v468 = vunpack.c.l.b16 %v105
  %v469 = vunpack.c.h.b16 %v105
  %v470 = vunpack.c.l.b16 %v106
  %v471 = vunpack.c.h.b16 %v106
  %v472 = vunpack.c.l.b16 %v107
  %v473 = vunpack.c.h.b16 %v107
  %v474 = vunpack.c.l.b16 %v108
  %v475 = vunpack.c.h.b16 %v108
  %v476 = vunpack.c.l.b16 %v109
  %v477 = vunpack.c.h.b16 %v109
  %v478 = vunpack.c.l.b16 %v110
  %v479 = vunpack.c.h.b16 %v110
  %v480 = vunpack.c.l.b16 %v111
  %v481 = vunpack.c.h.b16 %v111
  %v482 = vunpack.c.l.b16 %v112
  %v483 = vunpack.c.h.b16 %v112
  %v484 = vunpack.c.l.b16 %v113
  %v485 = vunpack.c.h.b16 %v113
  %v486 = vunpack.c.l.b16 %v114
  %v487 = vunpack.c.h.b16 %v114
  %v488 = vunpack.c.l.b16 %v115
  %v489 = vunpack.c.h.b16 %v115
  %v490 = vunpack.c.l.b16 %v116
  %v491 = vunpack.c.h.b16 %v116
  %v492 = vunpack.c.l.b16 %v117
  %v493 = vunpack.c.h.b16 %v117
  %v494 = vunpack.c.l.b16 %v118
  %v495 = vunpack.c.h.b16 %v118
  %v496 = vunpack.c.l.b16 %v119
  %v497 = vunpack.c.h.b16 %v119
  %v498 = vunpack.c.l.b16 %v120
  %v499 = vunpack.c.h.b16 %v120
  %v500 = vunpack.c.l.b16 %v121
  %v501 = vunpack.c.h.b16 %v121
  %v502 = vunpack.c.l.b16 %v122
  %v503 = vunpack.c.h.b16 %v122
  %v504 = vunpack.c.l.b16 %v123
  %v505 = vunpack.c.h.b16 %v123
  %v506 = vunpack.c.l.b16 %v124
  %v507 = vunpack.c.h.b16 %v124
  %v508 = vunpack.c.l.b16 %v125
  %v509 = vunpack.c.h.b16 %v125
  %v510 = vunpack.c.l.b16 %v126
  %v511 = vunpack.c.h.b16 %v126
  %v512 = vunpack.c.l.b16 %v127
  %v513 = vunpack.c.h.b16 %v127
  %v514 = vunpack.c.l.b16 %v128
  %v515 = vunpack.c.h.b16 %v128
  %v516 = vunpack.c.l.b16 %v129
  %v517 = vunpack.c.h.b16 %v129
  %v518 = vunpack.c.l.b16 %v130
  %v519 = vunpack.c.h.b16 %v130
  %v520 = vunpack.c.l.b16 %v131
  %v521 = vunpack.c.h.b16 %v131
  %v522 = vunpack.c.l.b16 %v132
  %v523 = vunpack.c.h.b16 %v132
  %v524 = vunpack.c.l.b16 %v133
  %v525 = vunpack.c.h.b16 %v133
  %v526 = vunpack.c.l.b16 %v134
  %v527 = vunpack.c.h.b16 %v134
  %v528 = vunpack.c.l.b16 %v135
  %v529 = vunpack.c.h.b16 %v135
  %v530 = vunpack.c.l.b16 %v136
  %v531 = vunpack.c.h.b16 %v136
  %v532 = vunpack.c.l.b16 %v137
  %v533 = vunpack.c.h.b16 %v137
  %v534 = vunpack.c.l.b16 %v138
  %v535 = vunpack.c.h.b16 %v138
  %v536 = vunpack.c.l.b16 %v139
  %v537 = vunpack.c.h.b16 %v139
  %v538 = vunpack.c.l.b16 %v140
  %v539 = vunpack.c.h.b16 %v140
  %v540 = vunpack.c.l.b16 %v141
  %v541 = vunpack.c.h.b16 %v141
  %v542 = vunpack.c.l.b16 %v142
  %v543 = vunpack.c.h.b16 %v142
  %v544 = vunpack.c.l.b16 %v143
  %v545 = vunpack.c.h.b16 %v143
  %v546 = vunpack.c.l.b16 %v144
  %v547 = vunpack.c.h.b16 %v144
  %v548 = vunpack.c.l.b16 %v145
  %v549 = vunpack.c.h.b16 %v145
  %v550 = vunpack.c.l.b16 %v146
  %v551 = vunpack.c.h.b16 %v146
  %v552 = vunpack.c.l.b16 %v147
  %v553 = vunpack.c.h.b16 %v147
  %v554 = vunpack.c.l.b16 %v148
  %v555 = vunpack.c.h.b16 %v148
  %v556 = vunpack.c.l.b16 %v149
  %v557 = vunpack.c.h.b16 %v149
  %v558 = vunpack.c.l.b16 %v150
  %v559 = vunpack.c.h.b16 %v150
  %v560 = vunpack.c.l.b16 %v151
  %v561 = vunpack.c.h.b16 %v151
  %v562 = vunpack.c.l.b16 %v152
  %v563 = vunpack.c.h.b16 %v152
  %v564 = vunpack.c.l.b16 %v153
  %v565 = vunpack.c.h.b16 %v153
  %v566 = vpack.c.b16 %v312, %v310
  %v567 = vpack.c.b16 %v313, %v311
  %v568 = vpack.c.b16 %v316, %v314
  %v569 = vpack.c.b16 %v317, %v315
  %v570 = vpack.c.b16 %v320, %v318
  %v571 = vpack.c.b16 %v321, %v319
  %v572 = vpack.c.b16 %v324, %v322
  %v573 = vpack.c.b16 %v325, %v323
  %v574 = vpack.c.b16 %v328, %v326
  %v575 = vpack.c.b16 %v329, %v327
  %v576 = vpack.c.b16 %v332, %v330
  %v577 = vpack.c.b16 %v333, %v331
  %v578 = vpack.c.b16 %v336, %v334
  %v579 = vpack.c.b16 %v337, %v335
  %v580 = vpack.c.b16 %v340, %v338
  %v581 = vpack.c.b16 %v341, %v339
  %v582 = vpack.c.b16 %v344, %v342
  %v583 = vpack.c.b16 %v345, %v343
  %v584 = vpack.c.b16 %v348, %v346
  %v585 = vpack.c.b16 %v349, %v347
  %v586 = vpack.c.b16 %v352, %v350
  %v587 = vpack.c.b16 %v353, %v351
  %v588 = vpack.c.b16 %v356, %v354
  %v589 = vpack.c.b16 %v357, %v355
  %v590 = vpack.c.b16 %v360, %v358
  %v591 = vpack.c.b16 %v361, %v359
  %v592 = vpack.c.b16 %v364, %v362
  %v593 = vpack.c.b16 %v365, %v363
  %v594 = vpack.c.b16 %v368, %v366
  %v595 = vpack.c.b16 %v369, %v367
  %v596 = vpack.c.b16 %v372, %v370
  %v597 = vpack.c.b16 %v373, %v371
  %v598 = vpack.c.b16 %v376, %v374
  %v599 = vpack.c.b16 %v377, %v375
  %v600 = vpack.c.b16 %v380, %v378
  %v601 = vpack.c.b16 %v381, %v379
  %v602 = vpack.c.b16 %v384, %v382
  %v603 = vpack.c.b16 %v385, %v383
  %v604 = vpack.c.b16 %v388, %v386
  %v605 = vpack.c.b16 %v389, %v387
  %v606 = vpack.c.b16 %v392, %v390
  %v607 = vpack.c.b16 %v393, %v391
  %v608 = vpack.c.b16 %v396, %v394
  %v609 = vpack.c.b16 %v397, %v395
  %v610 = vpack.c.b16 %v400, %v398
  %v611 = vpack.c.b16 %v401, %v399
  %v612 = vpack.c.b16 %v404, %v402
  %v613 = vpack.c.b16 %v405, %v403
  %v614 = vpack.c.b16 %v408, %v406
  %v615 = vpack.c.b16 %v409, %v407
  %v616 = vpack.c.b16 %v412, %v410
  %v617 = vpack.c.b16 %v413, %v411
  %v618 = vpack.c.b16 %v416, %v414
  %v619 = vpack.c.b16 %v417, %v415
  %v620 = vpack.c.b16 %v420, %v418
  %v621 = vpack.c.b16 %v421, %v419
  %v622 = vpack.c.b16 %v424, %v422
  %v623 = vpack.c.b16 %v425, %v423
  %v624 = vpack.c.b16 %v428, %v426
  %v625 = vpack.c.b16 %v429, %v427
  %v626 = vpack.c.b16 %v432, %v430
  %v627 = vpack.c.b16 %v433, %v431
  %v628 = vpack.c.b16 %v436, %v434
  %v629 = vpack.c.b16 %v437, %v435
  %v630 = vpack.c.b16 %v440, %v438
  %v631 = vpack.c.b16 %v441, %v439
  %v632 = vpack.c.b16 %v444, %v442
  %v633 = vpack.c.b16 %v445, %v443
  %v634 = vpack.c.b16 %v448, %v446
  %v635 = vpack.c.b16 %v449, %v447
  %v636 = vpack.c.b16 %v452, %v450
  %v637 = vpack.c.b16 %v453, %v451
  %v638 = vpack.c.b16 %v456, %v454
  %v639 = vpack.c.b16 %v457, %v455
  %v640 = vpack.c.b16 %v460, %v458
  %v641 = vpack.c.b16 %v461, %v459
  %v642 = vpack.c.b16 %v464, %v462
  %v643 = vpack.c.b16 %v465, %v463
  %v644 = vpack.c.b16 %v468, %v466
  %v645 = vpack.c.b16 %v469, %v467
  %v646 = vpack.c.b16 %v472, %v470
  %v647 = vpack.c.b16 %v473, %v471
  %v648 = vpack.c.b16 %v476, %v474
  %v649 = vpack.c.b16 %v477, %v475
  %v650 = vpack.c.b16 %v480, %v478
  %v651 = vpack.c.b16 %v481, %v479
  %v652 = vpack.c.b16 %v484, %v482
  %v653 = vpack.c.b16 %v485, %v483
  %v654 = vpack.c.b16 %v488, %v486
  %v655 = vpack.c.b16 %v489, %v487
  %v656 = vpack.c.b16 %v492, %v490
  %v657 = vpack.c.b16 %v493, %v491
  %v658 = vpack.c.b16 %v496, %v494
  %v659 = vpack.c.b16 %v497, %v495
  %v660 = vpack.c.b16 %v500, %v498
  %v661 = vpack.c.b16 %v501, %v499
  %v662 = vpack.c.b16 %v504, %v502
  %v663 = vpack.c.b16 %v505, %v503
  %v664 = vpack.c.b16 %v508, %v506
  %v665 = vpack.c.b16 %v509, %v507
  %v666 = vpack.c.b16 %v512, %v510
  %v667 = vpack.c.b16 %v513, %v511
  %v668 = vpack.c.b16 %v516, %v514
  %v669 = vpack.c.b16 %v517, %v515
  %v670 = vpack.c.b16 %v520, %v518
  %v671 = vpack.c.b16 %v521, %v519
  %v672 = vpack.c.b16 %v524, %v522
  %v673 = vpack.c.b16 %v525, %v523
  %v674 = vpack.c.b16 %v528, %v526
  %v675 = vpack.c.b16 %v529, %v527
  %v676 = vpack.c.b16 %v532, %v530
  %v677 = vpack.c.b16 %v533, %v531
  %v678 = vpack.c.b16 %v536, %v534
  %v679 = vpack.c.b16 %v537, %v535
  %v680 = vpack.c.b16 %v540, %v538
  %v681 = vpack.c.b16 %v541, %v539
  %v682 = vpack.c.b16 %v544, %v542
  %v683 = vpack.c.b16 %v545, %v543
  %v684 = vpack.c.b16 %v548, %v546
  %v685 = vpack.c.b16 %v549, %v547
  %v686 = vpack.c.b16 %v552, %v550
  %v687 = vpack.c.b16 %v553, %v551
  %v688 = vpack.c.b16 %v556, %v554
  %v689 = vpack.c.b16 %v557, %v555
  %v690 = vpack.c.b16 %v560, %v558
  %v691 = vpack.c.b16 %v561, %v559
  %v692 = vpack.c.b16 %v564, %v562
  %v693 = vpack.c.b16 %v565, %v563
  %822 = vmatprep.subr.bf16.mxu0 %v567
  %823 = vmatpush1.bf16.msra.mxu0 %v566
  %824 = vmatprep.subr.bf16.mxu0 %v569
  %825 = vmatpush1.bf16.msra.mxu0 %v568
  %826 = vmatprep.subr.bf16.mxu0 %v571
  %827 = vmatpush1.bf16.msra.mxu0 %v570
  %828 = vmatprep.subr.bf16.mxu0 %v573
  %829 = vmatpush1.bf16.msra.mxu0 %v572
  %830 = vmatprep.subr.bf16.mxu0 %v575
  %831 = vmatpush1.bf16.msra.mxu0 %v574
  %832 = vmatprep.subr.bf16.mxu0 %v577
  %833 = vmatpush1.bf16.msra.mxu0 %v576
  %834 = vmatprep.subr.bf16.mxu0 %v579
  %835 = vmatpush1.bf16.msra.mxu0 %v578
  %836 = vmatprep.subr.bf16.mxu0 %v581
  %837 = vmatpush1.bf16.msra.mxu0 %v580
  %838 = vmatprep.subr.bf16.mxu0 %v583
  %839 = vmatpush1.bf16.msra.mxu0 %v582
  %840 = vmatprep.subr.bf16.mxu0 %v585
  %841 = vmatpush1.bf16.msra.mxu0 %v584
  %842 = vmatprep.subr.bf16.mxu0 %v587
  %843 = vmatpush1.bf16.msra.mxu0 %v586
  %844 = vmatprep.subr.bf16.mxu0 %v589
  %845 = vmatpush1.bf16.msra.mxu0 %v588
  %846 = vmatprep.subr.bf16.mxu0 %v591
  %847 = vmatpush1.bf16.msra.mxu0 %v590
  %848 = vmatprep.subr.bf16.mxu0 %v593
  %849 = vmatpush1.bf16.msra.mxu0 %v592
  %850 = vmatprep.subr.bf16.mxu0 %v595
  %851 = vmatpush1.bf16.msra.mxu0 %v594
  %852 = vmatprep.subr.bf16.mxu0 %v597
  %853 = vmatpush1.bf16.msra.mxu0 %v596
  %854 = vmatprep.mubr.bf16.mxu0 %v167
  %855 = vmatmul.mubr.bf16.gmra.mrb[0].mxu0 %v166
  %v856 = vpop.f32.mrb[0].mxu0
  %v857 = vadd.f32 0.0, %v856
  %v858 = vpop.f32.mrb[0].mxu0
  %v859 = vadd.f32 0.0, %v858
  %v860 = vpop.f32.mrb[0].mxu0
  %v861 = vpop.f32.mrb[0].mxu0
  %862 = vdwg.mxu0
  %863 = vmatprep.subr.bf16.mxu0 %v599
  %864 = vmatpush1.bf16.msra.mxu0 %v598
  %865 = vmatprep.subr.bf16.mxu0 %v601
  %866 = vmatpush1.bf16.msra.mxu0 %v600
  %867 = vmatprep.subr.bf16.mxu0 %v603
  %868 = vmatpush1.bf16.msra.mxu0 %v602
  %869 = vmatprep.subr.bf16.mxu0 %v605
  %870 = vmatpush1.bf16.msra.mxu0 %v604
  %871 = vmatprep.subr.bf16.mxu0 %v607
  %872 = vmatpush1.bf16.msra.mxu0 %v606
  %873 = vmatprep.subr.bf16.mxu0 %v609
  %874 = vmatpush1.bf16.msra.mxu0 %v608
  %875 = vmatprep.subr.bf16.mxu0 %v611
  %876 = vmatpush1.bf16.msra.mxu0 %v610
  %877 = vmatprep.subr.bf16.mxu0 %v613
  %878 = vmatpush1.bf16.msra.mxu0 %v612
  %879 = vmatprep.subr.bf16.mxu0 %v615
  %880 = vmatpush1.bf16.msra.mxu0 %v614
  %881 = vmatprep.subr.bf16.mxu0 %v617
  %882 = vmatpush1.bf16.msra.mxu0 %v616
  %883 = vmatprep.subr.bf16.mxu0 %v619
  %884 = vmatpush1.bf16.msra.mxu0 %v618
  %885 = vmatprep.subr.bf16.mxu0 %v621
  %886 = vmatpush1.bf16.msra.mxu0 %v620
  %887 = vmatprep.subr.bf16.mxu0 %v623
  %888 = vmatpush1.bf16.msra.mxu0 %v622
  %889 = vmatprep.subr.bf16.mxu0 %v625
  %890 = vmatpush1.bf16.msra.mxu0 %v624
  %891 = vmatprep.subr.bf16.mxu0 %v627
  %892 = vmatpush1.bf16.msra.mxu0 %v626
  %893 = vmatprep.subr.bf16.mxu0 %v629
  %894 = vmatpush1.bf16.msra.mxu0 %v628
  %895 = vmatprep.mubr.bf16.mxu0 %v169
  %896 = vmatmul.mubr.bf16.gmra.mrb[0].mxu0 %v168
  %v897 = vpop.f32.mrb[0].mxu0
  %v898 = vadd.f32 %v857, %v897
  %v899 = vpop.f32.mrb[0].mxu0
  %v900 = vadd.f32 %v859, %v899
  %v901 = vpop.f32.mrb[0].mxu0
  %v902 = vpop.f32.mrb[0].mxu0
  %903 = vdwg.mxu0
  %904 = vmatprep.subr.bf16.mxu0 %v631
  %905 = vmatpush1.bf16.msra.mxu0 %v630
  %906 = vmatprep.subr.bf16.mxu0 %v633
  %907 = vmatpush1.bf16.msra.mxu0 %v632
  %908 = vmatprep.subr.bf16.mxu0 %v635
  %909 = vmatpush1.bf16.msra.mxu0 %v634
  %910 = vmatprep.subr.bf16.mxu0 %v637
  %911 = vmatpush1.bf16.msra.mxu0 %v636
  %912 = vmatprep.subr.bf16.mxu0 %v639
  %913 = vmatpush1.bf16.msra.mxu0 %v638
  %914 = vmatprep.subr.bf16.mxu0 %v641
  %915 = vmatpush1.bf16.msra.mxu0 %v640
  %916 = vmatprep.subr.bf16.mxu0 %v643
  %917 = vmatpush1.bf16.msra.mxu0 %v642
  %918 = vmatprep.subr.bf16.mxu0 %v645
  %919 = vmatpush1.bf16.msra.mxu0 %v644
  %920 = vmatprep.subr.bf16.mxu0 %v647
  %921 = vmatpush1.bf16.msra.mxu0 %v646
  %922 = vmatprep.subr.bf16.mxu0 %v649
  %923 = vmatpush1.bf16.msra.mxu0 %v648
  %924 = vmatprep.subr.bf16.mxu0 %v651
  %925 = vmatpush1.bf16.msra.mxu0 %v650
  %926 = vmatprep.subr.bf16.mxu0 %v653
  %927 = vmatpush1.bf16.msra.mxu0 %v652
  %928 = vmatprep.subr.bf16.mxu0 %v655
  %929 = vmatpush1.bf16.msra.mxu0 %v654
  %930 = vmatprep.subr.bf16.mxu0 %v657
  %931 = vmatpush1.bf16.msra.mxu0 %v656
  %932 = vmatprep.subr.bf16.mxu0 %v659
  %933 = vmatpush1.bf16.msra.mxu0 %v658
  %934 = vmatprep.subr.bf16.mxu0 %v661
  %935 = vmatpush1.bf16.msra.mxu0 %v660
  %936 = vmatprep.mubr.bf16.mxu0 %v171
  %937 = vmatmul.mubr.bf16.gmra.mrb[0].mxu0 %v170
  %v938 = vpop.f32.mrb[0].mxu0
  %v939 = vadd.f32 %v898, %v938
  %v940 = vpop.f32.mrb[0].mxu0
  %v941 = vadd.f32 %v900, %v940
  %v942 = vpop.f32.mrb[0].mxu0
  %v943 = vpop.f32.mrb[0].mxu0
  %944 = vdwg.mxu0
  %945 = vmatprep.subr.bf16.mxu0 %v663
  %946 = vmatpush1.bf16.msra.mxu0 %v662
  %947 = vmatprep.subr.bf16.mxu0 %v665
  %948 = vmatpush1.bf16.msra.mxu0 %v664
  %949 = vmatprep.subr.bf16.mxu0 %v667
  %950 = vmatpush1.bf16.msra.mxu0 %v666
  %951 = vmatprep.subr.bf16.mxu0 %v669
  %952 = vmatpush1.bf16.msra.mxu0 %v668
  %953 = vmatprep.subr.bf16.mxu0 %v671
  %954 = vmatpush1.bf16.msra.mxu0 %v670
  %955 = vmatprep.subr.bf16.mxu0 %v673
  %956 = vmatpush1.bf16.msra.mxu0 %v672
  %957 = vmatprep.subr.bf16.mxu0 %v675
  %958 = vmatpush1.bf16.msra.mxu0 %v674
  %959 = vmatprep.subr.bf16.mxu0 %v677
  %960 = vmatpush1.bf16.msra.mxu0 %v676
  %961 = vmatprep.subr.bf16.mxu0 %v679
  %962 = vmatpush1.bf16.msra.mxu0 %v678
  %963 = vmatprep.subr.bf16.mxu0 %v681
  %964 = vmatpush1.bf16.msra.mxu0 %v680
  %965 = vmatprep.subr.bf16.mxu0 %v683
  %966 = vmatpush1.bf16.msra.mxu0 %v682
  %967 = vmatprep.subr.bf16.mxu0 %v685
  %968 = vmatpush1.bf16.msra.mxu0 %v684
  %969 = vmatprep.subr.bf16.mxu0 %v687
  %970 = vmatpush1.bf16.msra.mxu0 %v686
  %971 = vmatprep.subr.bf16.mxu0 %v689
  %972 = vmatpush1.bf16.msra.mxu0 %v688
  %973 = vmatprep.subr.bf16.mxu0 %v691
  %974 = vmatpush1.bf16.msra.mxu0 %v690
  %975 = vmatprep.subr.bf16.mxu0 %v693
  %976 = vmatpush1.bf16.msra.mxu0 %v692
  %977 = vmatprep.mubr.bf16.mxu0 %v173
  %978 = vmatmul.mubr.bf16.gmra.mrb[0].mxu0 %v172
  %v979 = vpop.f32.mrb[0].mxu0
  %v980 = vadd.f32 %v939, %v979
  %v981 = vpop.f32.mrb[0].mxu0
  %v982 = vadd.f32 %v941, %v981
  %v983 = vpop.f32.mrb[0].mxu0
  %v984 = vpop.f32.mrb[0].mxu0
  %985 = vdwg.mxu0
  %v986 = vadd.f32 %v20, %v980
  %v987 = vadd.f32 %v21, %v982
  %988 = vst [vmem:[%s3] sm:$0xff] %v986
  %989 = vst [vmem:[%s3 + $0x8] sm:$0xff] %v987
  // Predicated region
  $region18: #{dann_backbone_forward.1} parent=0 // pred_check
    %p990 = pneg %p14
  $region19: #{dann_backbone_forward.1} parent=0 // pred_check_branch
    %992 = sbr.rel (%p990) target = $region21
  $region20: #{dann_backbone_forward.1} parent=0 // pred_region
    %v993 = vld [vmem:[%s3] sm:$0xff]
    %v994 = vld [vmem:[%s3 + $0x8] sm:$0xff]
    %v995 = vld [vmem:[%s2] sm:$0x3]
    %v997 = vlaneseq
    %v998 = vshrl.u32 %v997, 7
    %v999 = vsub.s32 0, %v998
    %v1000 = vrot.slane %v995, %v999
    %v1001 = vlaneseq
    %v1002 = vshrl.u32 %v1001, 7
    %v1003 = vsub.s32 1, %v1002
    %v1004 = vrot.slane %v995, %v1003
    %v1007 = vadd.f32 %v993, %v1000
    %v1008 = vadd.f32 %v994, %v1004
    %v1009 = vmax.f32 %v1007, 0.0
    %v1010 = vmax.f32 %v1008, 0.0
    %1011 = vst [vmem:[%s3] sm:$0xff] %v1009
    %1012 = vst [vmem:[%s3 + $0x8] sm:$0xff] %v1010
  $region21: #{dann_backbone_forward.1} parent=0 // pred_fallthru
    _
  // Predicated region
  $region22: #{dann_backbone_forward.1} parent=0 // pred_check
    _
  $region23: #{dann_backbone_forward.1} parent=0 // pred_check_branch
    %1014 = sbr.rel (0) target = $region25
  $region24: #{dann_backbone_forward.1} parent=0 // pred_region
    _
  $region25: #{dann_backbone_forward.1} parent=0 // pred_fallthru
    _
  // Predicated region
  $region26: #{dann_backbone_forward.1} parent=0 // pred_check
    _
  $region27: #{dann_backbone_forward.1} parent=0 // pred_check_branch
    %1016 = sbr.rel (0) target = $region29
  $region28: #{dann_backbone_forward.1} parent=0 // pred_region
    _
  $region29: #{dann_backbone_forward.1} parent=0 // pred_fallthru
    _

</llo_original>
